<compile_context>
chip_gen: v6e
topology: v6e:2x2x1
jax: 0.10.0
libtpu: 0.0.40
codegen_flags: <defaults>
</compile_context>

<pallas_src>
import jax
import jax.numpy as jnp
from jax.experimental import pallas as pl
from jax.experimental.pallas import tpu as pltpu


def _round_up(x, m):
    return (x + m - 1) // m * m


def _block_spec(shape, index_map, *, buffers=None):
    """BlockSpec with optional multi-buffering; falls back if pipeline_mode
    is unavailable in the installed jax version."""
    if buffers is None:
        return pl.BlockSpec(shape, index_map)
    try:
        return pl.BlockSpec(shape, index_map, pipeline_mode=pl.Buffered(buffers))
    except (TypeError, AttributeError):
        return pl.BlockSpec(shape, index_map)


# ---------------------------------------------------------------------------
# Fused kernel
#   grid = (batch tiles "parallel", K tiles over flattened pixels "arbitrary")
#   args : x[tb,tk], w_img[tk,Dp], tok^T[Ep,Cp], w_txt^T[Dp,Ep], scale (SMEM 1x1)
#   out  : logits[tb,Cp]  (resident across k, written at finalize)
#   scratch: img_acc[tb,Dp] f32, txtT_n[Dp,Cp] bf16 (normalized text, transposed)
# ---------------------------------------------------------------------------
def _fused_clip_kernel(x_ref, wimg_ref, tokT_ref, wtxtT_ref, scale_ref,
                       o_ref, img_acc, txtT_n):
    k = pl.program_id(1)
    nk = pl.num_programs(1)

    # Image "encoder" partial product for this K tile (bf16 MXU, f32 accumulate).
    partial = jnp.dot(x_ref[...].astype(jnp.bfloat16), wimg_ref[...],
                      preferred_element_type=jnp.float32)

    @pl.when(k == 0)
    def _init():
        # Direct write: no zero-fill + read-modify-write on the first K step.
        img_acc[...] = partial
        # Text "encoder" + L2-normalize (f32 math), stored transposed & bf16.
        # txt^T = w_txt^T @ tok^T  ->  [D_pad, C_pad]; norm is over D (axis 0).
        txtT = jnp.dot(wtxtT_ref[...], tokT_ref[...],
                       preferred_element_type=jnp.float32)
        inv = jax.lax.rsqrt(jnp.maximum(
            jnp.sum(txtT * txtT, axis=0, keepdims=True), 1e-12))
        txtT_n[...] = (txtT * inv).astype(txtT_n.dtype)

    @pl.when(k > 0)
    def _acc():
        img_acc[...] += partial

    @pl.when(k == nk - 1)
    def _finalize():
        img = img_acc[...]
        inv = jax.lax.rsqrt(jnp.maximum(
            jnp.sum(img * img, axis=-1, keepdims=True), 1e-12))
        img_n = (img * inv).astype(jnp.bfloat16)
        # Plain [tb, D] @ [D, C] matmul against the pre-transposed text scratch.
        logits = jnp.dot(img_n, txtT_n[...], preferred_element_type=jnp.float32)
        # logit_scale.exp() precomputed once (parameter-side); scalar from SMEM.
        o_ref[...] = (logits * scale_ref[0, 0]).astype(o_ref.dtype)


# ---------------------------------------------------------------------------
# One-time weight preparation (off the per-image path): pad, cast to bf16,
# pre-transpose the text operands, precompute logit_scale.exp().
# ---------------------------------------------------------------------------
def prepare_clip_weights(w_img, tok_emb, w_txt, logit_scale, *, tk=512):
    P, D = w_img.shape
    NC, E = tok_emb.shape

    tk = _round_up(min(tk, _round_up(P, 128)), 128)   # tk always a multiple of 128
    P_pad = _round_up(P, tk)
    D_pad = _round_up(D, 128)
    C_pad = _round_up(NC, 128)
    E_pad = _round_up(E, 128)

    bf = jnp.bfloat16
    wi_p = jnp.zeros((P_pad, D_pad), bf).at[:P, :D].set(w_img.astype(bf))
    tokT_p = jnp.zeros((E_pad, C_pad), bf).at[:E, :NC].set(tok_emb.T.astype(bf))
    wtT_p = jnp.zeros((D_pad, E_pad), bf).at[:D, :E].set(w_txt.T.astype(bf))
    # One-off scalar op on a parameter; identical to exp()-ing it every forward.
    scale = jnp.exp(jnp.asarray(logit_scale, jnp.float32).reshape(1, 1))

    return dict(wi_p=wi_p, tokT_p=tokT_p, wtT_p=wtT_p, scale=scale,
                P=P, D=D, NC=NC, tk=tk)


# ---------------------------------------------------------------------------
# CustomCLIP.forward wrapper
# ---------------------------------------------------------------------------
def custom_clip_forward(image, weights):
    """image [B,C,H,W], weights = prepare_clip_weights(...) -> logits [B, NC]."""
    wi_p, tokT_p, wtT_p, scale = (weights["wi_p"], weights["tokT_p"],
                                  weights["wtT_p"], weights["scale"])
    P, NC, tk = weights["P"], weights["NC"], weights["tk"]
    P_pad, D_pad = wi_p.shape
    E_pad, C_pad = tokT_p.shape

    B = image.shape[0]
    x = image.reshape(B, -1)                 # glue: flatten NCHW (stand-in ViT input)
    assert x.shape[1] == P

    # Batch tiling: (8,128)/bf16-sublane aligned; >=2 tiles when possible so the
    # "parallel" axis can shard across v7x's two TensorCores.
    B_pad = _round_up(B, 16)
    tb = min(B_pad, 256)
    if B_pad >= 32:
        tb = min(tb, _round_up(B_pad // 2, 16))
    B_pad = _round_up(B_pad, tb)

    if B == B_pad and P == P_pad:
        # Already aligned: pass straight through (no wrapper pad/cast HBM round
        # trip); the bf16 cast happens in-kernel right before the MXU.
        x_in = x
    else:
        x_in = jnp.zeros((B_pad, P_pad), jnp.bfloat16).at[:B, :P].set(
            x.astype(jnp.bfloat16))

    nk = P_pad // tk
    # Deeper pipelining on the streamed inputs only when per-step compute is
    # tiny and there are enough K steps for it to matter.
    stream_bufs = 3 if (tb <= 64 and nk >= 3) else 2

    # Explicit VMEM budget sized to the actual buffer sum (with 2x headroom),
    # clamped to physical limits (v7x has 64 MiB per TC).
    xb = x_in.dtype.itemsize
    vmem_bytes = (stream_bufs * tb * tk * xb            # x stream
                  + stream_bufs * tk * D_pad * 2        # w_img stream (bf16)
                  + C_pad * E_pad * 2 + E_pad * D_pad * 2   # constant text operands
                  + 2 * tb * C_pad * 4                  # output tile (f32)
                  + tb * D_pad * 4                      # img accumulator (f32)
                  + D_pad * C_pad * 2)                  # normalized text (bf16)
    vmem_limit = min(64 << 20, max(2 * vmem_bytes, 32 << 20))

    out = pl.pallas_call(
        _fused_clip_kernel,
        out_shape=jax.ShapeDtypeStruct((B_pad, C_pad), jnp.float32),
        grid=(B_pad // tb, nk),
        in_specs=[
            _block_spec((tb, tk), lambda i, k: (i, k), buffers=stream_bufs),
            _block_spec((tk, D_pad), lambda i, k: (k, 0), buffers=stream_bufs),
            _block_spec((E_pad, C_pad), lambda i, k: (0, 0), buffers=1),
            _block_spec((D_pad, E_pad), lambda i, k: (0, 0), buffers=1),
            pl.BlockSpec(memory_space=pltpu.MemorySpace.SMEM),   # exp(logit_scale)
        ],
        out_specs=pl.BlockSpec((tb, C_pad), lambda i, k: (i, 0)),
        scratch_shapes=[
            pltpu.VMEM((tb, D_pad), jnp.float32),      # image-feature accumulator
            pltpu.VMEM((D_pad, C_pad), jnp.bfloat16),  # normalized text^T (bf16)
        ],
        compiler_params=pltpu.CompilerParams(
            dimension_semantics=("parallel", "arbitrary"),
            vmem_limit_bytes=vmem_limit),
    )(x_in, wi_p, tokT_p, wtT_p, scale)

    return out[:B, :NC]


if __name__ == "__main__":
    key = jax.random.PRNGKey(0)
    B, C_in, H, W = 2, 4, 16, 16          # image: [2, 4, 16, 16]
    D = 64                                # joint embedding dim
    NUM_CLASSES = 8                       # len(classnames)
    E = 32                                # text token-embedding dim

    k1, k2, k3, k4 = jax.random.split(key, 4)
    image = jax.random.normal(k1, (B, C_in, H, W), jnp.float32)
    w_img = jax.random.normal(k2, (C_in * H * W, D), jnp.float32) * 0.02
    tok_emb = jax.random.normal(k3, (NUM_CLASSES, E), jnp.float32)
    w_txt = jax.random.normal(k4, (E, D), jnp.float32) * 0.02
    # CLIP initializes logit_scale = log(1/0.07); forward uses its exp().
    logit_scale = jnp.full((1, 1), jnp.log(1.0 / 0.07), jnp.float32)

    weights = prepare_clip_weights(w_img, tok_emb, w_txt, logit_scale, tk=512)
    logits = custom_clip_forward(image, weights)
    logits = jax.block_until_ready(logits)

    # Pure-JAX reference mirroring the bf16-operand / f32-accumulate matmuls and
    # the bf16 rounding of the normalized features fed to the logits matmul.
    bf = jnp.bfloat16
    x_flat = image.reshape(B, -1)
    img_f = jnp.dot(x_flat.astype(bf), w_img.astype(bf),
                    preferred_element_type=jnp.float32)
    txt_f = jnp.dot(tok_emb.astype(bf), w_txt.astype(bf),
                    preferred_element_type=jnp.float32)
    img_n = (img_f / jnp.linalg.norm(img_f, axis=-1, keepdims=True)).astype(bf)
    txt_n = (txt_f / jnp.linalg.norm(txt_f, axis=-1, keepdims=True)).astype(bf)
    ref = jnp.exp(logit_scale[0, 0]) * jnp.dot(
        img_n, txt_n.T, preferred_element_type=jnp.float32)

    assert logits.shape == (B, NUM_CLASSES)
    assert jnp.allclose(logits, ref, atol=5e-2, rtol=2e-2), (
        float(jnp.max(jnp.abs(logits - ref))))

    print("KERNEL_OK")
</pallas_src>

<mosaic_0001>
module attributes {stable_mosaic.version = 11 : i64} {
  func.func @_fused_clip_kernel(%arg0: i32, %arg1: i32, %arg2: memref<16x512xbf16, #tpu.memory_space<vmem>>, %arg3: memref<512x128xbf16, #tpu.memory_space<vmem>>, %arg4: memref<128x128xbf16, #tpu.memory_space<vmem>>, %arg5: memref<128x128xbf16, #tpu.memory_space<vmem>>, %arg6: memref<1x1xf32, #tpu.memory_space<smem>>, %arg7: memref<16x128xf32, #tpu.memory_space<vmem>>, %arg8: memref<16x128xf32, #tpu.memory_space<vmem>>, %arg9: memref<128x128xbf16, #tpu.memory_space<vmem>>) attributes {dimension_semantics = [#tpu.dimension_semantics<parallel>, #tpu.dimension_semantics<arbitrary>], iteration_bounds = array<i64: 1, 2>, scalar_prefetch = 0 : i64, scratch_operands = 2 : i64, tpu.core_type = #tpu.core_type<tc>, window_params = [{pipeline_mode = #tpu.pipeline_mode<double_buffered>, transform_indices = @transform_0, window_bounds = array<i64: 16, 512>}, {pipeline_mode = #tpu.pipeline_mode<double_buffered>, transform_indices = @transform_1, window_bounds = array<i64: 512, 128>}, {pipeline_mode = #tpu.pipeline_mode<synchronous>, transform_indices = @transform_2, window_bounds = array<i64: 128, 128>}, {pipeline_mode = #tpu.pipeline_mode<synchronous>, transform_indices = @transform_3, window_bounds = array<i64: 128, 128>}, {transform_indices = @transform_4, window_bounds = array<i64: 1, 1>}, {transform_indices = @transform_5, window_bounds = array<i64: 16, 128>}]} {
    %c0 = arith.constant 0 : index
    %c0_0 = arith.constant 0 : index
    %0 = vector.load %arg2[%c0, %c0_0] : memref<16x512xbf16, #tpu.memory_space<vmem>>, vector<16x512xbf16>
    %c0_1 = arith.constant 0 : index
    %c0_2 = arith.constant 0 : index
    %1 = vector.load %arg3[%c0_1, %c0_2] : memref<512x128xbf16, #tpu.memory_space<vmem>>, vector<512x128xbf16>
    %cst = arith.constant dense<0.000000e+00> : vector<16x128xf32>
    %2 = tpu.matmul %0, %1, %cst {dimension_numbers = #tpu.dot_dimension_numbers<[1], [0], [0], [1], [0, 0, 1, 1], [], []>} : vector<16x512xbf16>, vector<512x128xbf16>, vector<16x128xf32> -> vector<16x128xf32>
    %c0_i32 = arith.constant 0 : i32
    %3 = arith.cmpi eq, %arg1, %c0_i32 : i32
    %4 = arith.extui %3 : i1 to i32
    %c0_i32_3 = arith.constant 0 : i32
    %5 = arith.cmpi ne, %4, %c0_i32_3 : i32
    scf.if %5 {
      %c0_7 = arith.constant 0 : index
      %c0_8 = arith.constant 0 : index
      %12 = vector.load %arg8[%c0_7, %c0_8] : memref<16x128xf32, #tpu.memory_space<vmem>>, vector<16x128xf32>
      tpu.vector_store %arg8[%c0_7, %c0_8], %2 {strides = array<i32>} : memref<16x128xf32, #tpu.memory_space<vmem>>, vector<16x128xf32>,
      %c0_9 = arith.constant 0 : index
      %c0_10 = arith.constant 0 : index
      %13 = vector.load %arg5[%c0_9, %c0_10] : memref<128x128xbf16, #tpu.memory_space<vmem>>, vector<128x128xbf16>
      %c0_11 = arith.constant 0 : index
      %c0_12 = arith.constant 0 : index
      %14 = vector.load %arg4[%c0_11, %c0_12] : memref<128x128xbf16, #tpu.memory_space<vmem>>, vector<128x128xbf16>
      %cst_13 = arith.constant dense<0.000000e+00> : vector<128x128xf32>
      %15 = tpu.matmul %13, %14, %cst_13 {dimension_numbers = #tpu.dot_dimension_numbers<[1], [0], [0], [1], [0, 0, 1, 1], [], []>} : vector<128x128xbf16>, vector<128x128xbf16>, vector<128x128xf32> -> vector<128x128xf32>
      %16 = arith.mulf %15, %15 : vector<128x128xf32>
      %cst_14 = arith.constant dense<0.000000e+00> : vector<128xf32>
      %17 = vector.multi_reduction <add>, %16, %cst_14 [0] : vector<128x128xf32> to vector<128xf32>
      %18 = vector.shape_cast %17 : vector<128xf32> to vector<1x128xf32>
      %cst_15 = arith.constant 9.99999996E-13 : f32
      %19 = vector.broadcast %cst_15 : f32 to vector<1x128xf32>
      %20 = arith.maximumf %18, %19 : vector<1x128xf32>
      %21 = math.rsqrt %20 : vector<1x128xf32>
      %22 = vector.broadcast %21 : vector<1x128xf32> to vector<128x128xf32>
      %23 = arith.mulf %15, %22 : vector<128x128xf32>
      %24 = arith.truncf %23 : vector<128x128xf32> to vector<128x128xbf16>
      %c0_16 = arith.constant 0 : index
      %c0_17 = arith.constant 0 : index
      %25 = vector.load %arg9[%c0_16, %c0_17] : memref<128x128xbf16, #tpu.memory_space<vmem>>, vector<128x128xbf16>
      tpu.vector_store %arg9[%c0_16, %c0_17], %24 {strides = array<i32>} : memref<128x128xbf16, #tpu.memory_space<vmem>>, vector<128x128xbf16>,
    } else {
    }
    %c0_i32_4 = arith.constant 0 : i32
    %6 = arith.cmpi sgt, %arg1, %c0_i32_4 : i32
    %7 = arith.extui %6 : i1 to i32
    %c0_i32_5 = arith.constant 0 : i32
    %8 = arith.cmpi ne, %7, %c0_i32_5 : i32
    scf.if %8 {
      %c0_7 = arith.constant 0 : index
      %c0_8 = arith.constant 0 : index
      %12 = vector.load %arg8[%c0_7, %c0_8] : memref<16x128xf32, #tpu.memory_space<vmem>>, vector<16x128xf32>
      %13 = arith.addf %12, %2 : vector<16x128xf32>
      %c0_9 = arith.constant 0 : index
      %c0_10 = arith.constant 0 : index
      %14 = vector.load %arg8[%c0_9, %c0_10] : memref<16x128xf32, #tpu.memory_space<vmem>>, vector<16x128xf32>
      tpu.vector_store %arg8[%c0_9, %c0_10], %13 {strides = array<i32>} : memref<16x128xf32, #tpu.memory_space<vmem>>, vector<16x128xf32>,
    } else {
    }
    %c1_i32 = arith.constant 1 : i32
    %9 = arith.cmpi eq, %arg1, %c1_i32 : i32
    %10 = arith.extui %9 : i1 to i32
    %c0_i32_6 = arith.constant 0 : i32
    %11 = arith.cmpi ne, %10, %c0_i32_6 : i32
    scf.if %11 {
      %c0_7 = arith.constant 0 : index
      %c0_8 = arith.constant 0 : index
      %12 = vector.load %arg8[%c0_7, %c0_8] : memref<16x128xf32, #tpu.memory_space<vmem>>, vector<16x128xf32>
      %13 = arith.mulf %12, %12 : vector<16x128xf32>
      %cst_9 = arith.constant dense<0.000000e+00> : vector<16xf32>
      %14 = vector.multi_reduction <add>, %13, %cst_9 [1] : vector<16x128xf32> to vector<16xf32>
      %15 = vector.shape_cast %14 : vector<16xf32> to vector<16x1xf32>
      %cst_10 = arith.constant 9.99999996E-13 : f32
      %16 = vector.broadcast %cst_10 : f32 to vector<16x1xf32>
      %17 = arith.maximumf %15, %16 : vector<16x1xf32>
      %18 = math.rsqrt %17 : vector<16x1xf32>
      %19 = vector.broadcast %18 : vector<16x1xf32> to vector<16x128xf32>
      %20 = arith.mulf %12, %19 : vector<16x128xf32>
      %21 = arith.truncf %20 : vector<16x128xf32> to vector<16x128xbf16>
      %c0_11 = arith.constant 0 : index
      %c0_12 = arith.constant 0 : index
      %22 = vector.load %arg9[%c0_11, %c0_12] : memref<128x128xbf16, #tpu.memory_space<vmem>>, vector<128x128xbf16>
      %cst_13 = arith.constant dense<0.000000e+00> : vector<16x128xf32>
      %23 = tpu.matmul %21, %22, %cst_13 {dimension_numbers = #tpu.dot_dimension_numbers<[1], [0], [0], [1], [0, 0, 1, 1], [], []>} : vector<16x128xbf16>, vector<128x128xbf16>, vector<16x128xf32> -> vector<16x128xf32>
      %c0_14 = arith.constant 0 : index
      %c0_15 = arith.constant 0 : index
      %24 = memref.load %arg6[%c0_14, %c0_15] : memref<1x1xf32, #tpu.memory_space<smem>>
      %25 = vector.broadcast %24 : f32 to vector<16x128xf32>
      %26 = arith.mulf %23, %25 : vector<16x128xf32>
      %c0_16 = arith.constant 0 : index
      %c0_17 = arith.constant 0 : index
      %27 = vector.load %arg7[%c0_16, %c0_17] : memref<16x128xf32, #tpu.memory_space<vmem>>, vector<16x128xf32>
      tpu.vector_store %arg7[%c0_16, %c0_17], %26 {strides = array<i32>} : memref<16x128xf32, #tpu.memory_space<vmem>>, vector<16x128xf32>,
    } else {
    }
    return
  }
  func.func @transform_0(%arg0: i32, %arg1: i32) -> (i32, i32) {
    %c0_i32 = arith.constant 0 : i32
    return %arg0, %arg1 : i32, i32
  }
  func.func @transform_1(%arg0: i32, %arg1: i32) -> (i32, i32) {
    %c0_i32 = arith.constant 0 : i32
    %c0_i32_0 = arith.constant 0 : i32
    return %arg1, %c0_i32 : i32, i32
  }
  func.func @transform_2(%arg0: i32, %arg1: i32) -> (i32, i32) {
    %c0_i32 = arith.constant 0 : i32
    %c0_i32_0 = arith.constant 0 : i32
    %c0_i32_1 = arith.constant 0 : i32
    return %c0_i32, %c0_i32_0 : i32, i32
  }
  func.func @transform_3(%arg0: i32, %arg1: i32) -> (i32, i32) {
    %c0_i32 = arith.constant 0 : i32
    %c0_i32_0 = arith.constant 0 : i32
    %c0_i32_1 = arith.constant 0 : i32
    return %c0_i32, %c0_i32_0 : i32, i32
  }
  func.func @transform_4(%arg0: i32, %arg1: i32) -> (i32, i32) {
    %c0_i32 = arith.constant 0 : i32
    %c0_i32_0 = arith.constant 0 : i32
    %c0_i32_1 = arith.constant 0 : i32
    return %c0_i32, %c0_i32_0 : i32, i32
  }
  func.func @transform_5(%arg0: i32, %arg1: i32) -> (i32, i32) {
    %c0_i32 = arith.constant 0 : i32
    %c0_i32_0 = arith.constant 0 : i32
    return %arg0, %c0_i32 : i32, i32
  }
}

</mosaic_0001>

<llo_original>
// kernel: tpu_custom_call.1
$region0: #{tpu_custom_call.1}
  #allocation0 [shape = 'u32[]', space=smem, size = 0x4, offset = 0x4, fixed_abs, tag = 'smem constant byte address 0x4 - core index']
  #allocation1 [shape = 'u32[144,128]{1,0:T(1,128)}', space=vmem, size = 0x12000, scoped, tag = 'internal scratch']
  #allocation2 [shape = 'f32[16,128]{1,0:T(8,128)}', space=vmem, size = 0x2000, scoped, tag = 'scratch operand']
  #allocation3 [shape = 'bf16[128,128]{1,0:T(8,128)(2,1)}', space=vmem, size = 0x8000, scoped, tag = 'scratch operand']
  #allocation4 [shape = 'f32[1,1]{1,0:T(1,128)S(6)}', space=smem, size = 0x200, scoped, tag = 'scoped memory for tpu_custom_call.1']
  %s0 = inlined_call_operand.hbm [shape: bf16[16,1024], index: 0, kind: input, shape index: {}]
  %s1 = inlined_call_operand.hbm [shape: bf16[1024,128], index: 1, kind: input, shape index: {}]
  %s2 = inlined_call_operand.hbm [shape: bf16[128,128], index: 2, kind: input, shape index: {}]
  %s3 = inlined_call_operand.hbm [shape: bf16[128,128], index: 3, kind: input, shape index: {}]
  %s4 = inlined_call_operand.<no memory space> [shape: f32[1,1], index: 4, kind: input, shape index: {}]
  %s5 = inlined_call_operand.hbm [shape: f32[16,128], index: 5, kind: output, shape index: {}]
  %s6 = sld [smem:[#allocation0]]
  $region81: #{tpu_custom_call.1} parent=0
    _
  %s8 = ssub.s32 1, %s6
  %s9 = scalar_select 0, %s8, %s6
  %10 = sst [smem:[#allocation4]] %s4
  $region1: #{tpu_custom_call.1} parent=0
    #allocation5 [shape = 'u8[32768]{0}', space=vmem, size = 0x8000, scoped, tag = 'input window, operand 0']
    #allocation6 [shape = 's32[2]{0}', space=sflag, size = 0x8, scoped, tag = 'scoped memory for tpu_custom_call.1']
    #allocation7 [shape = 's32[2]{0}', space=sflag, size = 0x8, scoped, tag = 'scoped memory for tpu_custom_call.1']
    #allocation8 [shape = 'u8[262144]{0}', space=vmem, size = 0x40000, scoped, tag = 'input window, operand 1']
    #allocation9 [shape = 's32[2]{0}', space=sflag, size = 0x8, scoped, tag = 'scoped memory for tpu_custom_call.1']
    #allocation10 [shape = 'u8[32768]{0}', space=vmem, size = 0x8000, scoped, tag = 'input window, operand 2, single buffered']
    #allocation11 [shape = 'u8[32768]{0}', space=vmem, size = 0x8000, scoped, tag = 'input window, operand 3, single buffered']
    #allocation12 [shape = 's32[1]{0}', space=sflag, size = 0x4, scoped, tag = 'scoped memory for tpu_custom_call.1']
    #allocation13 [shape = 'u8[8192]{0}', space=vmem, size = 0x2000, scoped, tag = 'output window, operand 0, single buffered']
    %11 = vsyncpa [#allocation6], 0
    %s12 = scalar_lea.sflag [#allocation6], 1
    %13 = vsyncpa %s12, 0
    %14 = vsyncpa [#allocation9], 0
    %s15 = scalar_lea.sflag [#allocation9], 1
    %16 = vsyncpa %s15, 0
    %17 = vsyncpa [#allocation12], 0
    %18 = vsyncpa [#allocation7], 0
    loop: start=0, step=1, limit=4
    $region2: #{tpu_custom_call.1} parent=1 // loop_pre_header
      _
    $region3: #{tpu_custom_call.1} parent=1 // loop_header
      %s20 = sphi 0, %s24
      %p21 = scmp.ge.s32.totalorder %s20, 4
      %s27 = sphi 0, %s39
      %s28 = sphi 0, %s35
      %s29 = sphi 0, %s27
      %s30 = sphi 0, %s28
      %s31 = sphi 0, %s29
      %s32 = sphi 0, %s30
      %s44 = sphi 0, %s46
      %s47 = sphi 0, %s44
      %s48 = sphi 0, %s47
      %s64 = sphi 0, %s48
      %s70 = sphi 0, %s72
      %s73 = sphi 0, %s70
      %s74 = sphi 0, %s73
      %s90 = sphi 0, %s74
      %s94 = sphi 0, %s94
      %s96 = sphi 0, %s94
      %s97 = sphi 0, %s96
      %s111 = sphi 0, %s97
      %s115 = sphi 0, %s115
      %s117 = sphi 0, %s115
      %s118 = sphi 0, %s117
      %s132 = sphi 0, %s118
      %s136 = sphi 0, %s136
      %s138 = sphi 0, %s136
      %s139 = sphi 0, %s138
      %s153 = sphi 0, %s139
      %s159 = sphi 0, %s161
      %s162 = sphi 0, %s159
      %s163 = sphi 0, %s162
      %s179 = sphi 0, %s163
    $region4: #{tpu_custom_call.1} parent=1 // loop_header_branch
      %23 = sbr.rel (%p21) target = $region8
    $region5: #{tpu_custom_call.1} parent=1 // loop_body
      %s25 = ssub.s32 %s20, 1
      %s26 = ssub.s32 %s20, 2
      %s33 = sadd.s32 1, %s28
      %p34 = scmp.ge.s32.totalorder %s33, 2
      %s35 = scalar_select %p34, 0, %s33
      %s36 = sadd.s32 1, %s27
      %s37 = scalar_select %p34, %s36, %s27
      %p38 = scmp.ge.s32.totalorder %s37, 1
      %s39 = scalar_select %p38, 0, %s37
      %s40 = ssub.s32 %s27, %s39
      %s41 = ssub.s32 %s28, %s35
      %s42 = sor.u32 %s40, %s41
      %p43 = scmp.eq.s32.totalorder %s42, 0
      %s45 = sadd.s32 %s44, 1
      %s46 = scalar_select %p43, %s44, %s45
      %p49 = pneg %p43
      %p50 = scmp.eq.s32.totalorder %s20, 1
      %p51 = por %p49, %p50
      %p52 = scmp.ne.s32.totalorder %s44, %s47
      %p53 = scmp.eq.s32.totalorder %s20, 0
      %p54 = por %p52, %p53
      %p55 = scmp.ne.s32.totalorder %s44, %s47
      %p56 = scmp.eq.s32.totalorder %s25, 1
      %p57 = por %p55, %p56
      %p58 = scmp.ne.s32.totalorder %s47, %s48
      %p59 = scmp.eq.s32.totalorder %s25, 0
      %p60 = por %p58, %p59
      %p61 = scmp.ne.s32.totalorder %s47, %s48
      %p62 = scmp.eq.s32.totalorder %s26, 1
      %p63 = por %p61, %p62
      %p65 = scmp.ne.s32.totalorder %s48, %s64
      %p66 = scmp.eq.s32.totalorder %s26, 0
      %p67 = por %p65, %p66
      %s68 = ssub.s32 %s28, %s35
      %p69 = scmp.eq.s32.totalorder %s68, 0
      %s71 = sadd.s32 %s70, 1
      %s72 = scalar_select %p69, %s70, %s71
      %p75 = pneg %p69
      %p76 = scmp.eq.s32.totalorder %s20, 1
      %p77 = por %p75, %p76
      %p78 = scmp.ne.s32.totalorder %s70, %s73
      %p79 = scmp.eq.s32.totalorder %s20, 0
      %p80 = por %p78, %p79
      %p81 = scmp.ne.s32.totalorder %s70, %s73
      %p82 = scmp.eq.s32.totalorder %s25, 1
      %p83 = por %p81, %p82
      %p84 = scmp.ne.s32.totalorder %s73, %s74
      %p85 = scmp.eq.s32.totalorder %s25, 0
      %p86 = por %p84, %p85
      %p87 = scmp.ne.s32.totalorder %s73, %s74
      %p88 = scmp.eq.s32.totalorder %s26, 1
      %p89 = por %p87, %p88
      %p91 = scmp.ne.s32.totalorder %s74, %s90
      %p92 = scmp.eq.s32.totalorder %s26, 0
      %p93 = por %p91, %p92
      %s95 = sadd.s32 %s94, 1
      %p98 = scmp.eq.s32.totalorder %s20, 1
      %p99 = scmp.ne.s32.totalorder %s94, %s96
      %p100 = scmp.eq.s32.totalorder %s20, 0
      %p101 = por %p99, %p100
      %p102 = scmp.ne.s32.totalorder %s94, %s96
      %p103 = scmp.eq.s32.totalorder %s25, 1
      %p104 = por %p102, %p103
      %p105 = scmp.ne.s32.totalorder %s96, %s97
      %p106 = scmp.eq.s32.totalorder %s25, 0
      %p107 = por %p105, %p106
      %p108 = scmp.ne.s32.totalorder %s96, %s97
      %p109 = scmp.eq.s32.totalorder %s26, 1
      %p110 = por %p108, %p109
      %p112 = scmp.ne.s32.totalorder %s97, %s111
      %p113 = scmp.eq.s32.totalorder %s26, 0
      %p114 = por %p112, %p113
      %s116 = sadd.s32 %s115, 1
      %p119 = scmp.eq.s32.totalorder %s20, 1
      %p120 = scmp.ne.s32.totalorder %s115, %s117
      %p121 = scmp.eq.s32.totalorder %s20, 0
      %p122 = por %p120, %p121
      %p123 = scmp.ne.s32.totalorder %s115, %s117
      %p124 = scmp.eq.s32.totalorder %s25, 1
      %p125 = por %p123, %p124
      %p126 = scmp.ne.s32.totalorder %s117, %s118
      %p127 = scmp.eq.s32.totalorder %s25, 0
      %p128 = por %p126, %p127
      %p129 = scmp.ne.s32.totalorder %s117, %s118
      %p130 = scmp.eq.s32.totalorder %s26, 1
      %p131 = por %p129, %p130
      %p133 = scmp.ne.s32.totalorder %s118, %s132
      %p134 = scmp.eq.s32.totalorder %s26, 0
      %p135 = por %p133, %p134
      %s137 = sadd.s32 %s136, 1
      %p140 = scmp.eq.s32.totalorder %s20, 1
      %p141 = scmp.ne.s32.totalorder %s136, %s138
      %p142 = scmp.eq.s32.totalorder %s20, 0
      %p143 = por %p141, %p142
      %p144 = scmp.ne.s32.totalorder %s136, %s138
      %p145 = scmp.eq.s32.totalorder %s25, 1
      %p146 = por %p144, %p145
      %p147 = scmp.ne.s32.totalorder %s138, %s139
      %p148 = scmp.eq.s32.totalorder %s25, 0
      %p149 = por %p147, %p148
      %p150 = scmp.ne.s32.totalorder %s138, %s139
      %p151 = scmp.eq.s32.totalorder %s26, 1
      %p152 = por %p150, %p151
      %p154 = scmp.ne.s32.totalorder %s139, %s153
      %p155 = scmp.eq.s32.totalorder %s26, 0
      %p156 = por %p154, %p155
      %s157 = ssub.s32 %s27, %s39
      %p158 = scmp.eq.s32.totalorder %s157, 0
      %s160 = sadd.s32 %s159, 1
      %s161 = scalar_select %p158, %s159, %s160
      %p164 = pneg %p158
      %p165 = scmp.eq.s32.totalorder %s20, 1
      %p166 = por %p164, %p165
      %p167 = scmp.ne.s32.totalorder %s159, %s162
      %p168 = scmp.eq.s32.totalorder %s20, 0
      %p169 = por %p167, %p168
      %p170 = scmp.ne.s32.totalorder %s159, %s162
      %p171 = scmp.eq.s32.totalorder %s25, 1
      %p172 = por %p170, %p171
      %p173 = scmp.ne.s32.totalorder %s162, %s163
      %p174 = scmp.eq.s32.totalorder %s25, 0
      %p175 = por %p173, %p174
      %p176 = scmp.ne.s32.totalorder %s162, %s163
      %p177 = scmp.eq.s32.totalorder %s26, 1
      %p178 = por %p176, %p177
      %p180 = scmp.ne.s32.totalorder %s163, %s179
      %p181 = scmp.eq.s32.totalorder %s26, 0
      %p182 = por %p180, %p181
      %p183 = scmp.le.s32.totalorder 1, %s20
      %p184 = scmp.lt.s32.totalorder %s20, 3
      %p185 = pnand %p183, %p184
      %p186 = pneg %p185
      // Predicated region
      $region9: #{tpu_custom_call.1} parent=5 // pred_check
        _
      $region10: #{tpu_custom_call.1} parent=5 // pred_check_branch
        %188 = sbr.rel (%p185) target = $region12
      $region11: #{tpu_custom_call.1} parent=5 // pred_region
        %s189 = ssub.s32 %s20, 1
        // Predicated region
        $region13: #{tpu_custom_call.1} parent=11 // pred_check
          %p190 = pneg %p107
        $region14: #{tpu_custom_call.1} parent=11 // pred_check_branch
          %192 = sbr.rel (%p190) target = $region16
        $region15: #{tpu_custom_call.1} parent=11 // pred_region
          %s194 = ssub.s32 1024, 1024
          %195 = vsyncadd [#allocation9], %s194
          %s196 = sshll.u32 [#allocation10], 4
          %s197 = int_to_ptr.vmem [resolvable:$true] %s196
          %202 = dma.hbm_to_vmem [thread:$0]  %s2, 1024, %s197, [#allocation9], 64, 64, 4
        $region16: #{tpu_custom_call.1} parent=11 // pred_fallthru
          _
        // Predicated region
        $region17: #{tpu_custom_call.1} parent=11 // pred_check
          %p203 = pneg %p128
        $region18: #{tpu_custom_call.1} parent=11 // pred_check_branch
          %205 = sbr.rel (%p203) target = $region20
        $region19: #{tpu_custom_call.1} parent=11 // pred_region
          %s207 = ssub.s32 1024, 1024
          %208 = vsyncadd [#allocation12], %s207
          %s209 = sshll.u32 [#allocation11], 4
          %s210 = int_to_ptr.vmem [resolvable:$true] %s209
          %215 = dma.hbm_to_vmem [thread:$0]  %s3, 1024, %s210, [#allocation12], 64, 64, 4
        $region20: #{tpu_custom_call.1} parent=11 // pred_fallthru
          _
        // Predicated region
        $region21: #{tpu_custom_call.1} parent=11 // pred_check
          %p216 = pneg %p149
        $region22: #{tpu_custom_call.1} parent=11 // pred_check_branch
          %218 = sbr.rel (%p216) target = $region24
        $region23: #{tpu_custom_call.1} parent=11 // pred_region
          _
        $region24: #{tpu_custom_call.1} parent=11 // pred_fallthru
          _
      $region12: #{tpu_custom_call.1} parent=5 // pred_fallthru
        _
      %p219 = scmp.lt.s32.totalorder %s20, 2
      // Predicated region
      $region25: #{tpu_custom_call.1} parent=5 // pred_check
        %p220 = pneg %p219
      $region26: #{tpu_custom_call.1} parent=5 // pred_check_branch
        %222 = sbr.rel (%p220) target = $region28
      $region27: #{tpu_custom_call.1} parent=5 // pred_region
        // Predicated region
        $region29: #{tpu_custom_call.1} parent=27 // pred_check
          %p223 = pneg %p54
        $region30: #{tpu_custom_call.1} parent=27 // pred_check_branch
          %225 = sbr.rel (%p223) target = $region32
        $region31: #{tpu_custom_call.1} parent=27 // pred_region
          %s226 = sand.u32 %s44, 1
          %s227 = scalar_lea.sflag [#allocation6], %s226
          %s228 = sand.u32 %s44, 1
          %s229 = smul.addr %s228, 32
          %s230 = scalar_lea.vmem [#allocation5], %s229
          %s231 = smul.u32 2, %s27
          %s232 = smul.u32 4, %s28
          %s234 = ssub.s32 512, 512
          %235 = vsyncadd %s227, %s234
          %s236 = smul.addr %s231, 8
          %s237 = sadd.s32 %s232, %s236
          %s238 = smul.addr %s237, 64
          %s239 = scalar_lea.hbm %s0, %s238
          %s240 = sshll.u32 %s230, 4
          %s241 = int_to_ptr.vmem [resolvable:$true] %s240
          %246 = dma.hbm_to_vmem [thread:$0]  %s239, 512, %s241, %s227, 512, 256, 16
        $region32: #{tpu_custom_call.1} parent=27 // pred_fallthru
          _
        // Predicated region
        $region33: #{tpu_custom_call.1} parent=27 // pred_check
          %p247 = pneg %p80
        $region34: #{tpu_custom_call.1} parent=27 // pred_check_branch
          %249 = sbr.rel (%p247) target = $region36
        $region35: #{tpu_custom_call.1} parent=27 // pred_region
          %s250 = sand.u32 %s20, 1
          %s251 = scalar_lea.sflag [#allocation9], %s250
          %s252 = sand.u32 %s70, 1
          %s253 = smul.addr %s252, 256
          %s254 = scalar_lea.vmem [#allocation8], %s253
          %s255 = smul.u32 64, %s28
          %s257 = ssub.s32 4096, 4096
          %258 = vsyncadd %s251, %s257
          %s259 = smul.addr %s255, 64
          %s260 = scalar_lea.hbm %s1, %s259
          %s261 = sshll.u32 %s254, 4
          %s262 = int_to_ptr.vmem [resolvable:$true] %s261
          %267 = dma.hbm_to_vmem [thread:$0]  %s260, 4096, %s262, %s251, 64, 64, 4
        $region36: #{tpu_custom_call.1} parent=27 // pred_fallthru
          _
      $region28: #{tpu_custom_call.1} parent=5 // pred_fallthru
        _
      %p268 = scmp.le.s32.totalorder 1, %s20
      %p269 = scmp.lt.s32.totalorder %s20, 3
      %p270 = pnand %p268, %p269
      %p271 = pneg %p270
      // Predicated region
      $region37: #{tpu_custom_call.1} parent=5 // pred_check
        _
      $region38: #{tpu_custom_call.1} parent=5 // pred_check_branch
        %273 = sbr.rel (%p270) target = $region40
      $region39: #{tpu_custom_call.1} parent=5 // pred_region
        %s274 = ssub.s32 %s20, 1
        %s275 = sand.u32 %s47, 1
        %s276 = scalar_lea.sflag [#allocation6], %s275
        %s277 = sand.u32 %s47, 1
        %s278 = smul.addr %s277, 32
        %s279 = scalar_lea.vmem [#allocation5], %s278
        // Predicated region
        $region41: #{tpu_custom_call.1} parent=39 // pred_check
          %p280 = pneg %p60
        $region42: #{tpu_custom_call.1} parent=39 // pred_check_branch
          %282 = sbr.rel (%p280) target = $region44
        $region43: #{tpu_custom_call.1} parent=39 // pred_region
          %283 = dma.done %s276, 512
        $region44: #{tpu_custom_call.1} parent=39 // pred_fallthru
          _
        %s284 = sand.u32 %s25, 1
        %s285 = scalar_lea.sflag [#allocation9], %s284
        %s286 = sand.u32 %s73, 1
        %s287 = smul.addr %s286, 256
        %s288 = scalar_lea.vmem [#allocation8], %s287
        // Predicated region
        $region45: #{tpu_custom_call.1} parent=39 // pred_check
          %p289 = pneg %p86
        $region46: #{tpu_custom_call.1} parent=39 // pred_check_branch
          %291 = sbr.rel (%p289) target = $region48
        $region47: #{tpu_custom_call.1} parent=39 // pred_region
          %292 = dma.done %s285, 4096
        $region48: #{tpu_custom_call.1} parent=39 // pred_fallthru
          _
        // Predicated region
        $region49: #{tpu_custom_call.1} parent=39 // pred_check
          %p293 = pneg %p107
        $region50: #{tpu_custom_call.1} parent=39 // pred_check_branch
          %295 = sbr.rel (%p293) target = $region52
        $region51: #{tpu_custom_call.1} parent=39 // pred_region
          %296 = dma.done [#allocation9], 1024
        $region52: #{tpu_custom_call.1} parent=39 // pred_fallthru
          _
        // Predicated region
        $region53: #{tpu_custom_call.1} parent=39 // pred_check
          %p297 = pneg %p128
        $region54: #{tpu_custom_call.1} parent=39 // pred_check_branch
          %299 = sbr.rel (%p297) target = $region56
        $region55: #{tpu_custom_call.1} parent=39 // pred_region
          %300 = dma.done [#allocation12], 1024
        $region56: #{tpu_custom_call.1} parent=39 // pred_fallthru
          _
        %s301 = sand.u32 %s47, 1
        %s302 = scalar_lea.sflag [#allocation6], %s301
        %s303 = sand.u32 %s47, 1
        %s304 = smul.addr %s303, 32
        %s305 = scalar_lea.vmem [#allocation5], %s304
        %p306 = pneg %p60
        %p307 = pneg %p57
        %s308 = sand.u32 %s25, 1
        %s309 = scalar_lea.sflag [#allocation9], %s308
        %s310 = sand.u32 %s73, 1
        %s311 = smul.addr %s310, 256
        %s312 = scalar_lea.vmem [#allocation8], %s311
        %p313 = pneg %p86
        %p314 = pneg %p83
        %p315 = pneg %p107
        %p316 = pneg %p104
        %p317 = pneg %p128
        %p318 = pneg %p125
        %p319 = pneg %p149
        %p320 = pneg %p146
        %p321 = pneg %p175
        %p322 = pneg %p172
        %s323 = smul.u32 2, %s29
        %s324 = smul.u32 4, %s30
        %s325 = smul.u32 64, %s30
        %s326 = smul.u32 2, %s29
        %v328 = vld [vmem:[%s279] sm:$0xff]
        %v329 = vld [vmem:[%s279 + $0x8] sm:$0xff]
        %v330 = vld [vmem:[%s279 + $0x10] sm:$0xff]
        %v331 = vld [vmem:[%s279 + $0x18] sm:$0xff]
        %v332 = vld [vmem:[%s288] sm:$0xf]
        %v333 = vld [vmem:[%s288 + $0x4] sm:$0xf]
        %v334 = vld [vmem:[%s288 + $0x8] sm:$0xf]
        %v335 = vld [vmem:[%s288 + $0xc] sm:$0xf]
        %v336 = vld [vmem:[%s288 + $0x10] sm:$0xf]
        %v337 = vld [vmem:[%s288 + $0x14] sm:$0xf]
        %v338 = vld [vmem:[%s288 + $0x18] sm:$0xf]
        %v339 = vld [vmem:[%s288 + $0x1c] sm:$0xf]
        %v340 = vld [vmem:[%s288 + $0x20] sm:$0xf]
        %v341 = vld [vmem:[%s288 + $0x24] sm:$0xf]
        %v342 = vld [vmem:[%s288 + $0x28] sm:$0xf]
        %v343 = vld [vmem:[%s288 + $0x2c] sm:$0xf]
        %v344 = vld [vmem:[%s288 + $0x30] sm:$0xf]
        %v345 = vld [vmem:[%s288 + $0x34] sm:$0xf]
        %v346 = vld [vmem:[%s288 + $0x38] sm:$0xf]
        %v347 = vld [vmem:[%s288 + $0x3c] sm:$0xf]
        %v348 = vld [vmem:[%s288 + $0x40] sm:$0xf]
        %v349 = vld [vmem:[%s288 + $0x44] sm:$0xf]
        %v350 = vld [vmem:[%s288 + $0x48] sm:$0xf]
        %v351 = vld [vmem:[%s288 + $0x4c] sm:$0xf]
        %v352 = vld [vmem:[%s288 + $0x50] sm:$0xf]
        %v353 = vld [vmem:[%s288 + $0x54] sm:$0xf]
        %v354 = vld [vmem:[%s288 + $0x58] sm:$0xf]
        %v355 = vld [vmem:[%s288 + $0x5c] sm:$0xf]
        %v356 = vld [vmem:[%s288 + $0x60] sm:$0xf]
        %v357 = vld [vmem:[%s288 + $0x64] sm:$0xf]
        %v358 = vld [vmem:[%s288 + $0x68] sm:$0xf]
        %v359 = vld [vmem:[%s288 + $0x6c] sm:$0xf]
        %v360 = vld [vmem:[%s288 + $0x70] sm:$0xf]
        %v361 = vld [vmem:[%s288 + $0x74] sm:$0xf]
        %v362 = vld [vmem:[%s288 + $0x78] sm:$0xf]
        %v363 = vld [vmem:[%s288 + $0x7c] sm:$0xf]
        %v364 = vld [vmem:[%s288 + $0x80] sm:$0xf]
        %v365 = vld [vmem:[%s288 + $0x84] sm:$0xf]
        %v366 = vld [vmem:[%s288 + $0x88] sm:$0xf]
        %v367 = vld [vmem:[%s288 + $0x8c] sm:$0xf]
        %v368 = vld [vmem:[%s288 + $0x90] sm:$0xf]
        %v369 = vld [vmem:[%s288 + $0x94] sm:$0xf]
        %v370 = vld [vmem:[%s288 + $0x98] sm:$0xf]
        %v371 = vld [vmem:[%s288 + $0x9c] sm:$0xf]
        %v372 = vld [vmem:[%s288 + $0xa0] sm:$0xf]
        %v373 = vld [vmem:[%s288 + $0xa4] sm:$0xf]
        %v374 = vld [vmem:[%s288 + $0xa8] sm:$0xf]
        %v375 = vld [vmem:[%s288 + $0xac] sm:$0xf]
        %v376 = vld [vmem:[%s288 + $0xb0] sm:$0xf]
        %v377 = vld [vmem:[%s288 + $0xb4] sm:$0xf]
        %v378 = vld [vmem:[%s288 + $0xb8] sm:$0xf]
        %v379 = vld [vmem:[%s288 + $0xbc] sm:$0xf]
        %v380 = vld [vmem:[%s288 + $0xc0] sm:$0xf]
        %v381 = vld [vmem:[%s288 + $0xc4] sm:$0xf]
        %v382 = vld [vmem:[%s288 + $0xc8] sm:$0xf]
        %v383 = vld [vmem:[%s288 + $0xcc] sm:$0xf]
        %v384 = vld [vmem:[%s288 + $0xd0] sm:$0xf]
        %v385 = vld [vmem:[%s288 + $0xd4] sm:$0xf]
        %v386 = vld [vmem:[%s288 + $0xd8] sm:$0xf]
        %v387 = vld [vmem:[%s288 + $0xdc] sm:$0xf]
        %v388 = vld [vmem:[%s288 + $0xe0] sm:$0xf]
        %v389 = vld [vmem:[%s288 + $0xe4] sm:$0xf]
        %v390 = vld [vmem:[%s288 + $0xe8] sm:$0xf]
        %v391 = vld [vmem:[%s288 + $0xec] sm:$0xf]
        %v392 = vld [vmem:[%s288 + $0xf0] sm:$0xf]
        %v393 = vld [vmem:[%s288 + $0xf4] sm:$0xf]
        %v394 = vld [vmem:[%s288 + $0xf8] sm:$0xf]
        %v395 = vld [vmem:[%s288 + $0xfc] sm:$0xf]
        %v400 = vunpack.c.l.b16 %v328
        %v401 = vunpack.c.h.b16 %v328
        %v402 = vunpack.c.l.b16 %v329
        %v403 = vunpack.c.h.b16 %v329
        %v404 = vunpack.c.l.b16 %v330
        %v405 = vunpack.c.h.b16 %v330
        %v406 = vunpack.c.l.b16 %v331
        %v407 = vunpack.c.h.b16 %v331
        %v408 = vpack.c.b16 %v404, %v400
        %v409 = vpack.c.b16 %v405, %v401
        %v410 = vpack.c.b16 %v406, %v402
        %v411 = vpack.c.b16 %v407, %v403
        %v480 = vunpack.c.l.b16 %v332
        %v481 = vunpack.c.l.b16 %v333
        %v482 = vunpack.c.l.b16 %v334
        %v483 = vunpack.c.l.b16 %v335
        %v484 = vunpack.c.l.b16 %v336
        %v485 = vunpack.c.l.b16 %v337
        %v486 = vunpack.c.l.b16 %v338
        %v487 = vunpack.c.l.b16 %v339
        %v488 = vunpack.c.l.b16 %v340
        %v489 = vunpack.c.l.b16 %v341
        %v490 = vunpack.c.l.b16 %v342
        %v491 = vunpack.c.l.b16 %v343
        %v492 = vunpack.c.l.b16 %v344
        %v493 = vunpack.c.l.b16 %v345
        %v494 = vunpack.c.l.b16 %v346
        %v495 = vunpack.c.l.b16 %v347
        %v496 = vunpack.c.l.b16 %v348
        %v497 = vunpack.c.l.b16 %v349
        %v498 = vunpack.c.l.b16 %v350
        %v499 = vunpack.c.l.b16 %v351
        %v500 = vunpack.c.l.b16 %v352
        %v501 = vunpack.c.l.b16 %v353
        %v502 = vunpack.c.l.b16 %v354
        %v503 = vunpack.c.l.b16 %v355
        %v504 = vunpack.c.l.b16 %v356
        %v505 = vunpack.c.l.b16 %v357
        %v506 = vunpack.c.l.b16 %v358
        %v507 = vunpack.c.l.b16 %v359
        %v508 = vunpack.c.l.b16 %v360
        %v509 = vunpack.c.l.b16 %v361
        %v510 = vunpack.c.l.b16 %v362
        %v511 = vunpack.c.l.b16 %v363
        %v512 = vunpack.c.l.b16 %v364
        %v513 = vunpack.c.l.b16 %v365
        %v514 = vunpack.c.l.b16 %v366
        %v515 = vunpack.c.l.b16 %v367
        %v516 = vunpack.c.l.b16 %v368
        %v517 = vunpack.c.l.b16 %v369
        %v518 = vunpack.c.l.b16 %v370
        %v519 = vunpack.c.l.b16 %v371
        %v520 = vunpack.c.l.b16 %v372
        %v521 = vunpack.c.l.b16 %v373
        %v522 = vunpack.c.l.b16 %v374
        %v523 = vunpack.c.l.b16 %v375
        %v524 = vunpack.c.l.b16 %v376
        %v525 = vunpack.c.l.b16 %v377
        %v526 = vunpack.c.l.b16 %v378
        %v527 = vunpack.c.l.b16 %v379
        %v528 = vunpack.c.l.b16 %v380
        %v529 = vunpack.c.l.b16 %v381
        %v530 = vunpack.c.l.b16 %v382
        %v531 = vunpack.c.l.b16 %v383
        %v532 = vunpack.c.l.b16 %v384
        %v533 = vunpack.c.l.b16 %v385
        %v534 = vunpack.c.l.b16 %v386
        %v535 = vunpack.c.l.b16 %v387
        %v536 = vunpack.c.l.b16 %v388
        %v537 = vunpack.c.l.b16 %v389
        %v538 = vunpack.c.l.b16 %v390
        %v539 = vunpack.c.l.b16 %v391
        %v540 = vunpack.c.l.b16 %v392
        %v541 = vunpack.c.l.b16 %v393
        %v542 = vunpack.c.l.b16 %v394
        %v543 = vunpack.c.l.b16 %v395
        %v544 = vpack.c.b16 %v481, %v480
        %v545 = vpack.c.b16 %v483, %v482
        %v546 = vpack.c.b16 %v485, %v484
        %v547 = vpack.c.b16 %v487, %v486
        %v548 = vpack.c.b16 %v489, %v488
        %v549 = vpack.c.b16 %v491, %v490
        %v550 = vpack.c.b16 %v493, %v492
        %v551 = vpack.c.b16 %v495, %v494
        %v552 = vpack.c.b16 %v497, %v496
        %v553 = vpack.c.b16 %v499, %v498
        %v554 = vpack.c.b16 %v501, %v500
        %v555 = vpack.c.b16 %v503, %v502
        %v556 = vpack.c.b16 %v505, %v504
        %v557 = vpack.c.b16 %v507, %v506
        %v558 = vpack.c.b16 %v509, %v508
        %v559 = vpack.c.b16 %v511, %v510
        %v560 = vpack.c.b16 %v513, %v512
        %v561 = vpack.c.b16 %v515, %v514
        %v562 = vpack.c.b16 %v517, %v516
        %v563 = vpack.c.b16 %v519, %v518
        %v564 = vpack.c.b16 %v521, %v520
        %v565 = vpack.c.b16 %v523, %v522
        %v566 = vpack.c.b16 %v525, %v524
        %v567 = vpack.c.b16 %v527, %v526
        %v568 = vpack.c.b16 %v529, %v528
        %v569 = vpack.c.b16 %v531, %v530
        %v570 = vpack.c.b16 %v533, %v532
        %v571 = vpack.c.b16 %v535, %v534
        %v572 = vpack.c.b16 %v537, %v536
        %v573 = vpack.c.b16 %v539, %v538
        %v574 = vpack.c.b16 %v541, %v540
        %v575 = vpack.c.b16 %v543, %v542
        %608 = vmatprep.subr.bf16.mxu0 0
        %609 = vmatpush1.bf16.msra.mxu0 %v551
        %610 = vmatprep.subr.bf16.mxu0 0
        %611 = vmatpush1.bf16.msra.mxu0 %v550
        %612 = vmatprep.subr.bf16.mxu0 0
        %613 = vmatpush1.bf16.msra.mxu0 %v549
        %614 = vmatprep.subr.bf16.mxu0 0
        %615 = vmatpush1.bf16.msra.mxu0 %v548
        %616 = vmatprep.subr.bf16.mxu0 0
        %617 = vmatpush1.bf16.msra.mxu0 %v547
        %618 = vmatprep.subr.bf16.mxu0 0
        %619 = vmatpush1.bf16.msra.mxu0 %v546
        %620 = vmatprep.subr.bf16.mxu0 0
        %621 = vmatpush1.bf16.msra.mxu0 %v545
        %622 = vmatprep.subr.bf16.mxu0 0
        %623 = vmatpush1.bf16.msra.mxu0 %v544
        %624 = vmatprep.subr.bf16.mxu0 0
        %625 = vmatpush2.bf16.msra.mxu0 %v559
        %626 = vmatprep.subr.bf16.mxu0 0
        %627 = vmatpush2.bf16.msra.mxu0 %v558
        %628 = vmatprep.subr.bf16.mxu0 0
        %629 = vmatpush2.bf16.msra.mxu0 %v557
        %630 = vmatprep.subr.bf16.mxu0 0
        %631 = vmatpush2.bf16.msra.mxu0 %v556
        %632 = vmatprep.subr.bf16.mxu0 0
        %633 = vmatpush2.bf16.msra.mxu0 %v555
        %634 = vmatprep.subr.bf16.mxu0 0
        %635 = vmatpush2.bf16.msra.mxu0 %v554
        %636 = vmatprep.subr.bf16.mxu0 0
        %637 = vmatpush2.bf16.msra.mxu0 %v553
        %638 = vmatprep.subr.bf16.mxu0 0
        %639 = vmatpush2.bf16.msra.mxu0 %v552
        %640 = vmatprep.mubr.bf16.mxu0 %v409
        %641 = vmatmul.mubr.bf16.gmra.mxu0 %v408
        %v642 = vpop.f32.mrf.mxu0
        %v643 = vadd.f32 0.0, %v642
        %v644 = vpop.f32.mrf.mxu0
        %v645 = vpop.f32.mrf.mxu0
        %v646 = vadd.f32 0.0, %v645
        %v647 = vpop.f32.mrf.mxu0
        %648 = vdwg.mxu0
        %649 = vmatprep.subr.bf16.mxu0 0
        %650 = vmatpush1.bf16.msra.mxu0 %v567
        %651 = vmatprep.subr.bf16.mxu0 0
        %652 = vmatpush1.bf16.msra.mxu0 %v566
        %653 = vmatprep.subr.bf16.mxu0 0
        %654 = vmatpush1.bf16.msra.mxu0 %v565
        %655 = vmatprep.subr.bf16.mxu0 0
        %656 = vmatpush1.bf16.msra.mxu0 %v564
        %657 = vmatprep.subr.bf16.mxu0 0
        %658 = vmatpush1.bf16.msra.mxu0 %v563
        %659 = vmatprep.subr.bf16.mxu0 0
        %660 = vmatpush1.bf16.msra.mxu0 %v562
        %661 = vmatprep.subr.bf16.mxu0 0
        %662 = vmatpush1.bf16.msra.mxu0 %v561
        %663 = vmatprep.subr.bf16.mxu0 0
        %664 = vmatpush1.bf16.msra.mxu0 %v560
        %665 = vmatprep.subr.bf16.mxu0 0
        %666 = vmatpush2.bf16.msra.mxu0 %v575
        %667 = vmatprep.subr.bf16.mxu0 0
        %668 = vmatpush2.bf16.msra.mxu0 %v574
        %669 = vmatprep.subr.bf16.mxu0 0
        %670 = vmatpush2.bf16.msra.mxu0 %v573
        %671 = vmatprep.subr.bf16.mxu0 0
        %672 = vmatpush2.bf16.msra.mxu0 %v572
        %673 = vmatprep.subr.bf16.mxu0 0
        %674 = vmatpush2.bf16.msra.mxu0 %v571
        %675 = vmatprep.subr.bf16.mxu0 0
        %676 = vmatpush2.bf16.msra.mxu0 %v570
        %677 = vmatprep.subr.bf16.mxu0 0
        %678 = vmatpush2.bf16.msra.mxu0 %v569
        %679 = vmatprep.subr.bf16.mxu0 0
        %680 = vmatpush2.bf16.msra.mxu0 %v568
        %681 = vmatprep.mubr.bf16.mxu0 %v411
        %682 = vmatmul.mubr.bf16.gmra.mxu0 %v410
        %v683 = vpop.f32.mrf.mxu0
        %v684 = vadd.f32 %v643, %v683
        %v685 = vpop.f32.mrf.mxu0
        %v686 = vpop.f32.mrf.mxu0
        %v687 = vadd.f32 %v646, %v686
        %v688 = vpop.f32.mrf.mxu0
        %689 = vdwg.mxu0
        %p690 = scmp.eq.s32.totalorder %s30, 0
        // Predicated region
        $region57: #{tpu_custom_call.1} parent=39 // pred_check
          %p691 = pneg %p690
        $region58: #{tpu_custom_call.1} parent=39 // pred_check_branch
          %693 = sbr.rel (%p691) target = $region60
        $region59: #{tpu_custom_call.1} parent=39 // pred_region
          %694 = vst [vmem:[#allocation2] sm:$0xff] %v684
          %695 = vst [vmem:[#allocation2 + $0x8] sm:$0xff] %v687
          %v696 = vld [vmem:[#allocation11] sm:$0xf]
          %v697 = vld [vmem:[#allocation11 + $0x4] sm:$0xf]
          %v698 = vld [vmem:[#allocation11 + $0x8] sm:$0xf]
          %v699 = vld [vmem:[#allocation11 + $0xc] sm:$0xf]
          %v700 = vld [vmem:[#allocation11 + $0x10] sm:$0xf]
          %v701 = vld [vmem:[#allocation11 + $0x14] sm:$0xf]
          %v702 = vld [vmem:[#allocation11 + $0x18] sm:$0xf]
          %v703 = vld [vmem:[#allocation11 + $0x1c] sm:$0xf]
          %v704 = vld [vmem:[#allocation11 + $0x20] sm:$0xf]
          %v705 = vld [vmem:[#allocation11 + $0x24] sm:$0xf]
          %v706 = vld [vmem:[#allocation11 + $0x28] sm:$0xf]
          %v707 = vld [vmem:[#allocation11 + $0x2c] sm:$0xf]
          %v708 = vld [vmem:[#allocation11 + $0x30] sm:$0xf]
          %v709 = vld [vmem:[#allocation11 + $0x34] sm:$0xf]
          %v710 = vld [vmem:[#allocation11 + $0x38] sm:$0xf]
          %v711 = vld [vmem:[#allocation11 + $0x3c] sm:$0xf]
          %v712 = vld [vmem:[#allocation10] sm:$0xf]
          %v713 = vld [vmem:[#allocation10 + $0x4] sm:$0xf]
          %v714 = vld [vmem:[#allocation10 + $0x8] sm:$0xf]
          %v715 = vld [vmem:[#allocation10 + $0xc] sm:$0xf]
          %v716 = vld [vmem:[#allocation10 + $0x10] sm:$0xf]
          %v717 = vld [vmem:[#allocation10 + $0x14] sm:$0xf]
          %v718 = vld [vmem:[#allocation10 + $0x18] sm:$0xf]
          %v719 = vld [vmem:[#allocation10 + $0x1c] sm:$0xf]
          %v720 = vld [vmem:[#allocation10 + $0x20] sm:$0xf]
          %v721 = vld [vmem:[#allocation10 + $0x24] sm:$0xf]
          %v722 = vld [vmem:[#allocation10 + $0x28] sm:$0xf]
          %v723 = vld [vmem:[#allocation10 + $0x2c] sm:$0xf]
          %v724 = vld [vmem:[#allocation10 + $0x30] sm:$0xf]
          %v725 = vld [vmem:[#allocation10 + $0x34] sm:$0xf]
          %v726 = vld [vmem:[#allocation10 + $0x38] sm:$0xf]
          %v727 = vld [vmem:[#allocation10 + $0x3c] sm:$0xf]
          %v744 = vunpack.c.l.b16 %v696
          %v745 = vunpack.c.l.b16 %v697
          %v746 = vunpack.c.l.b16 %v698
          %v747 = vunpack.c.l.b16 %v699
          %v748 = vunpack.c.l.b16 %v700
          %v749 = vunpack.c.l.b16 %v701
          %v750 = vunpack.c.l.b16 %v702
          %v751 = vunpack.c.l.b16 %v703
          %v752 = vunpack.c.l.b16 %v704
          %v753 = vunpack.c.l.b16 %v705
          %v754 = vunpack.c.l.b16 %v706
          %v755 = vunpack.c.l.b16 %v707
          %v756 = vunpack.c.l.b16 %v708
          %v757 = vunpack.c.l.b16 %v709
          %v758 = vunpack.c.l.b16 %v710
          %v759 = vunpack.c.l.b16 %v711
          %v760 = vpack.c.b16 %v745, %v744
          %v761 = vpack.c.b16 %v747, %v746
          %v762 = vpack.c.b16 %v749, %v748
          %v763 = vpack.c.b16 %v751, %v750
          %v764 = vpack.c.b16 %v753, %v752
          %v765 = vpack.c.b16 %v755, %v754
          %v766 = vpack.c.b16 %v757, %v756
          %v767 = vpack.c.b16 %v759, %v758
          %v792 = vunpack.c.l.b16 %v712
          %v793 = vunpack.c.l.b16 %v713
          %v794 = vunpack.c.l.b16 %v714
          %v795 = vunpack.c.l.b16 %v715
          %v796 = vunpack.c.l.b16 %v716
          %v797 = vunpack.c.l.b16 %v717
          %v798 = vunpack.c.l.b16 %v718
          %v799 = vunpack.c.l.b16 %v719
          %v800 = vunpack.c.l.b16 %v720
          %v801 = vunpack.c.l.b16 %v721
          %v802 = vunpack.c.l.b16 %v722
          %v803 = vunpack.c.l.b16 %v723
          %v804 = vunpack.c.l.b16 %v724
          %v805 = vunpack.c.l.b16 %v725
          %v806 = vunpack.c.l.b16 %v726
          %v807 = vunpack.c.l.b16 %v727
          %v808 = vpack.c.b16 %v793, %v792
          %v809 = vpack.c.b16 %v795, %v794
          %v810 = vpack.c.b16 %v797, %v796
          %v811 = vpack.c.b16 %v799, %v798
          %v812 = vpack.c.b16 %v801, %v800
          %v813 = vpack.c.b16 %v803, %v802
          %v814 = vpack.c.b16 %v805, %v804
          %v815 = vpack.c.b16 %v807, %v806
          %824 = vmatprep.subr.bf16.mxu0 0
          %825 = vmatpush1.bf16.msra.mxu0 %v815
          %826 = vmatprep.subr.bf16.mxu0 0
          %827 = vmatpush1.bf16.msra.mxu0 %v814
          %828 = vmatprep.subr.bf16.mxu0 0
          %829 = vmatpush1.bf16.msra.mxu0 %v813
          %830 = vmatprep.subr.bf16.mxu0 0
          %831 = vmatpush1.bf16.msra.mxu0 %v812
          %832 = vmatprep.subr.bf16.mxu0 0
          %833 = vmatpush1.bf16.msra.mxu0 %v811
          %834 = vmatprep.subr.bf16.mxu0 0
          %835 = vmatpush1.bf16.msra.mxu0 %v810
          %836 = vmatprep.subr.bf16.mxu0 0
          %837 = vmatpush1.bf16.msra.mxu0 %v809
          %838 = vmatprep.subr.bf16.mxu0 0
          %839 = vmatpush1.bf16.msra.mxu0 %v808
          %840 = vmatprep.subr.bf16.mxu0 0
          %841 = vmatpush2.bf16.msra.mxu0 0
          %842 = vmatprep.subr.bf16.mxu0 0
          %843 = vmatpush2.bf16.msra.mxu0 0
          %844 = vmatprep.subr.bf16.mxu0 0
          %845 = vmatpush2.bf16.msra.mxu0 0
          %846 = vmatprep.subr.bf16.mxu0 0
          %847 = vmatpush2.bf16.msra.mxu0 0
          %848 = vmatprep.subr.bf16.mxu0 0
          %849 = vmatpush2.bf16.msra.mxu0 0
          %850 = vmatprep.subr.bf16.mxu0 0
          %851 = vmatpush2.bf16.msra.mxu0 0
          %852 = vmatprep.subr.bf16.mxu0 0
          %853 = vmatpush2.bf16.msra.mxu0 0
          %854 = vmatprep.subr.bf16.mxu0 0
          %855 = vmatpush2.bf16.msra.mxu0 0
          %856 = vmatprep.mubr.bf16.mxu0 0
          %857 = vmatmul.mubr.bf16.gmra.mxu0 %v760
          %v858 = vpop.f32.mrf.mxu0
          %v859 = vadd.f32 0.0, %v858
          %v860 = vpop.f32.mrf.mxu0
          %v861 = vpop.f32.mrf.mxu0
          %v862 = vadd.f32 0.0, %v861
          %v863 = vpop.f32.mrf.mxu0
          %864 = vmatprep.mubr.bf16.mxu0 0
          %865 = vmatmul.mubr.bf16.gmra.mxu0 %v761
          %v866 = vpop.f32.mrf.mxu0
          %v867 = vadd.f32 0.0, %v866
          %v868 = vpop.f32.mrf.mxu0
          %v869 = vpop.f32.mrf.mxu0
          %v870 = vadd.f32 0.0, %v869
          %v871 = vpop.f32.mrf.mxu0
          %872 = vmatprep.mubr.bf16.mxu0 0
          %873 = vmatmul.mubr.bf16.gmra.mxu0 %v762
          %v874 = vpop.f32.mrf.mxu0
          %v875 = vadd.f32 0.0, %v874
          %v876 = vpop.f32.mrf.mxu0
          %v877 = vpop.f32.mrf.mxu0
          %v878 = vadd.f32 0.0, %v877
          %v879 = vpop.f32.mrf.mxu0
          %880 = vmatprep.mubr.bf16.mxu0 0
          %881 = vmatmul.mubr.bf16.gmra.mxu0 %v763
          %v882 = vpop.f32.mrf.mxu0
          %v883 = vadd.f32 0.0, %v882
          %v884 = vpop.f32.mrf.mxu0
          %v885 = vpop.f32.mrf.mxu0
          %v886 = vadd.f32 0.0, %v885
          %v887 = vpop.f32.mrf.mxu0
          %888 = vmatprep.mubr.bf16.mxu0 0
          %889 = vmatmul.mubr.bf16.gmra.mxu0 %v764
          %v890 = vpop.f32.mrf.mxu0
          %v891 = vadd.f32 0.0, %v890
          %v892 = vpop.f32.mrf.mxu0
          %v893 = vpop.f32.mrf.mxu0
          %v894 = vadd.f32 0.0, %v893
          %v895 = vpop.f32.mrf.mxu0
          %896 = vmatprep.mubr.bf16.mxu0 0
          %897 = vmatmul.mubr.bf16.gmra.mxu0 %v765
          %v898 = vpop.f32.mrf.mxu0
          %v899 = vadd.f32 0.0, %v898
          %v900 = vpop.f32.mrf.mxu0
          %v901 = vpop.f32.mrf.mxu0
          %v902 = vadd.f32 0.0, %v901
          %v903 = vpop.f32.mrf.mxu0
          %904 = vmatprep.mubr.bf16.mxu0 0
          %905 = vmatmul.mubr.bf16.gmra.mxu0 %v766
          %v906 = vpop.f32.mrf.mxu0
          %v907 = vadd.f32 0.0, %v906
          %v908 = vpop.f32.mrf.mxu0
          %v909 = vpop.f32.mrf.mxu0
          %v910 = vadd.f32 0.0, %v909
          %v911 = vpop.f32.mrf.mxu0
          %912 = vmatprep.mubr.bf16.mxu0 0
          %913 = vmatmul.mubr.bf16.gmra.mxu0 %v767
          %v914 = vpop.f32.mrf.mxu0
          %v915 = vadd.f32 0.0, %v914
          %v916 = vpop.f32.mrf.mxu0
          %v917 = vpop.f32.mrf.mxu0
          %v918 = vadd.f32 0.0, %v917
          %v919 = vpop.f32.mrf.mxu0
          %920 = vdwg.mxu0
          %v921 = vmul.f32 %v859, %v859
          %v922 = vmul.f32 %v862, %v862
          %v923 = vmul.f32 %v867, %v867
          %v924 = vmul.f32 %v870, %v870
          %v925 = vmul.f32 %v875, %v875
          %v926 = vmul.f32 %v878, %v878
          %v927 = vmul.f32 %v883, %v883
          %v928 = vmul.f32 %v886, %v886
          %v929 = vmul.f32 %v891, %v891
          %v930 = vmul.f32 %v894, %v894
          %v931 = vmul.f32 %v899, %v899
          %v932 = vmul.f32 %v902, %v902
          %v933 = vmul.f32 %v907, %v907
          %v934 = vmul.f32 %v910, %v910
          %v935 = vmul.f32 %v915, %v915
          %v936 = vmul.f32 %v918, %v918
          %v937 = vadd.f32 %v921, %v922
          %v938 = vadd.f32 %v937, %v923
          %v939 = vadd.f32 %v938, %v924
          %v940 = vadd.f32 %v939, %v925
          %v941 = vadd.f32 %v940, %v926
          %v942 = vadd.f32 %v941, %v927
          %v943 = vadd.f32 %v942, %v928
          %v944 = vadd.f32 %v943, %v929
          %v945 = vadd.f32 %v944, %v930
          %v946 = vadd.f32 %v945, %v931
          %v947 = vadd.f32 %v946, %v932
          %v948 = vadd.f32 %v947, %v933
          %v949 = vadd.f32 %v948, %v934
          %v950 = vadd.f32 %v949, %v935
          %v951 = vadd.f32 %v950, %v936
          %v952 = vrot.slane %v951, 4
          %v953 = vadd.f32 %v951, %v952
          %v954 = vrot.slane %v953, 2
          %v955 = vadd.f32 %v953, %v954
          %v956 = vrot.slane %v955, 1
          %v957 = vadd.f32 %v955, %v956
          %v958 = vmax.f32 %v957, 1e-12
          %v959 = vrsqrt.pop %v958
          %v960 = vmul.f32 %v859, %v959
          %v961 = vmul.f32 %v862, %v959
          %v962 = vmul.f32 %v867, %v959
          %v963 = vmul.f32 %v870, %v959
          %v964 = vmul.f32 %v875, %v959
          %v965 = vmul.f32 %v878, %v959
          %v966 = vmul.f32 %v883, %v959
          %v967 = vmul.f32 %v886, %v959
          %v968 = vmul.f32 %v891, %v959
          %v969 = vmul.f32 %v894, %v959
          %v970 = vmul.f32 %v899, %v959
          %v971 = vmul.f32 %v902, %v959
          %v972 = vmul.f32 %v907, %v959
          %v973 = vmul.f32 %v910, %v959
          %v974 = vmul.f32 %v915, %v959
          %v975 = vmul.f32 %v918, %v959
          %v976 = vpack.c.bf16 %v961, %v960
          %v977 = vpack.c.bf16 %v963, %v962
          %v978 = vpack.c.bf16 %v965, %v964
          %v979 = vpack.c.bf16 %v967, %v966
          %v980 = vpack.c.bf16 %v969, %v968
          %v981 = vpack.c.bf16 %v971, %v970
          %v982 = vpack.c.bf16 %v973, %v972
          %v983 = vpack.c.bf16 %v975, %v974
          %v992 = vunpack.c.l.b16 %v976
          %v993 = vunpack.c.h.b16 %v976
          %v994 = vunpack.c.l.b16 %v977
          %v995 = vunpack.c.h.b16 %v977
          %v996 = vunpack.c.l.b16 %v978
          %v997 = vunpack.c.h.b16 %v978
          %v998 = vunpack.c.l.b16 %v979
          %v999 = vunpack.c.h.b16 %v979
          %v1000 = vunpack.c.l.b16 %v980
          %v1001 = vunpack.c.h.b16 %v980
          %v1002 = vunpack.c.l.b16 %v981
          %v1003 = vunpack.c.h.b16 %v981
          %v1004 = vunpack.c.l.b16 %v982
          %v1005 = vunpack.c.h.b16 %v982
          %v1006 = vunpack.c.l.b16 %v983
          %v1007 = vunpack.c.h.b16 %v983
          %v1008 = vpack.c.b16 %v992, %v992
          %v1009 = vpack.c.b16 %v993, %v993
          %v1010 = vpack.c.b16 %v994, %v994
          %v1011 = vpack.c.b16 %v995, %v995
          %v1012 = vpack.c.b16 %v996, %v996
          %v1013 = vpack.c.b16 %v997, %v997
          %v1014 = vpack.c.b16 %v998, %v998
          %v1015 = vpack.c.b16 %v999, %v999
          %v1016 = vpack.c.b16 %v1000, %v1000
          %v1017 = vpack.c.b16 %v1001, %v1001
          %v1018 = vpack.c.b16 %v1002, %v1002
          %v1019 = vpack.c.b16 %v1003, %v1003
          %v1020 = vpack.c.b16 %v1004, %v1004
          %v1021 = vpack.c.b16 %v1005, %v1005
          %v1022 = vpack.c.b16 %v1006, %v1006
          %v1023 = vpack.c.b16 %v1007, %v1007
          %1040 = vst [vmem:[#allocation3] sm:$0xf] %v1008
          %1041 = vst [vmem:[#allocation3 + $0x4] sm:$0xf] %v1009
          %1042 = vst [vmem:[#allocation3 + $0x8] sm:$0xf] %v1010
          %1043 = vst [vmem:[#allocation3 + $0xc] sm:$0xf] %v1011
          %1044 = vst [vmem:[#allocation3 + $0x10] sm:$0xf] %v1012
          %1045 = vst [vmem:[#allocation3 + $0x14] sm:$0xf] %v1013
          %1046 = vst [vmem:[#allocation3 + $0x18] sm:$0xf] %v1014
          %1047 = vst [vmem:[#allocation3 + $0x1c] sm:$0xf] %v1015
          %1048 = vst [vmem:[#allocation3 + $0x20] sm:$0xf] %v1016
          %1049 = vst [vmem:[#allocation3 + $0x24] sm:$0xf] %v1017
          %1050 = vst [vmem:[#allocation3 + $0x28] sm:$0xf] %v1018
          %1051 = vst [vmem:[#allocation3 + $0x2c] sm:$0xf] %v1019
          %1052 = vst [vmem:[#allocation3 + $0x30] sm:$0xf] %v1020
          %1053 = vst [vmem:[#allocation3 + $0x34] sm:$0xf] %v1021
          %1054 = vst [vmem:[#allocation3 + $0x38] sm:$0xf] %v1022
          %1055 = vst [vmem:[#allocation3 + $0x3c] sm:$0xf] %v1023
        $region60: #{tpu_custom_call.1} parent=39 // pred_fallthru
          _
        %p1056 = scmp.gt.s32.totalorder %s30, 0
        // Predicated region
        $region61: #{tpu_custom_call.1} parent=39 // pred_check
          %p1057 = pneg %p1056
        $region62: #{tpu_custom_call.1} parent=39 // pred_check_branch
          %1059 = sbr.rel (%p1057) target = $region64
        $region63: #{tpu_custom_call.1} parent=39 // pred_region
          %v1060 = vld [vmem:[#allocation2] sm:$0xff]
          %v1061 = vld [vmem:[#allocation2 + $0x8] sm:$0xff]
          %v1062 = vadd.f32 %v1060, %v684
          %v1063 = vadd.f32 %v1061, %v687
          %1064 = vst [vmem:[#allocation2] sm:$0xff] %v1062
          %1065 = vst [vmem:[#allocation2 + $0x8] sm:$0xff] %v1063
        $region64: #{tpu_custom_call.1} parent=39 // pred_fallthru
          _
        %p1066 = scmp.eq.s32.totalorder %s30, 1
        // Predicated region
        $region65: #{tpu_custom_call.1} parent=39 // pred_check
          %p1067 = pneg %p1066
        $region66: #{tpu_custom_call.1} parent=39 // pred_check_branch
          %1069 = sbr.rel (%p1067) target = $region68
        $region67: #{tpu_custom_call.1} parent=39 // pred_region
          %v1070 = vld [vmem:[#allocation2] sm:$0xff]
          %v1071 = vld [vmem:[#allocation2 + $0x8] sm:$0xff]
          %v1072 = vmul.f32 %v1070, %v1070
          %v1073 = vmul.f32 %v1071, %v1071
          %1074 = vadd.xlane.f32.xlu0 %v1072
          %v1075 = vpop.xlane.xlu0 %1074
          %1076 = vadd.xlane.f32.xlu0 %v1073
          %v1077 = vpop.xlane.xlu0 %1076
          %v1078 = vmax.f32 %v1075, 1e-12
          %v1079 = vmax.f32 %v1077, 1e-12
          %v1080 = vrsqrt.pop %v1078
          %v1081 = vrsqrt.pop %v1079
          %v1082 = vmul.f32 %v1070, %v1080
          %v1083 = vmul.f32 %v1071, %v1081
          %v1084 = vpack.c.bf16 %v1083, %v1082
          %v1085 = vld [vmem:[#allocation3] sm:$0xf]
          %v1086 = vld [vmem:[#allocation3 + $0x4] sm:$0xf]
          %v1087 = vld [vmem:[#allocation3 + $0x8] sm:$0xf]
          %v1088 = vld [vmem:[#allocation3 + $0xc] sm:$0xf]
          %v1089 = vld [vmem:[#allocation3 + $0x10] sm:$0xf]
          %v1090 = vld [vmem:[#allocation3 + $0x14] sm:$0xf]
          %v1091 = vld [vmem:[#allocation3 + $0x18] sm:$0xf]
          %v1092 = vld [vmem:[#allocation3 + $0x1c] sm:$0xf]
          %v1093 = vld [vmem:[#allocation3 + $0x20] sm:$0xf]
          %v1094 = vld [vmem:[#allocation3 + $0x24] sm:$0xf]
          %v1095 = vld [vmem:[#allocation3 + $0x28] sm:$0xf]
          %v1096 = vld [vmem:[#allocation3 + $0x2c] sm:$0xf]
          %v1097 = vld [vmem:[#allocation3 + $0x30] sm:$0xf]
          %v1098 = vld [vmem:[#allocation3 + $0x34] sm:$0xf]
          %v1099 = vld [vmem:[#allocation3 + $0x38] sm:$0xf]
          %v1100 = vld [vmem:[#allocation3 + $0x3c] sm:$0xf]
          %v1117 = vunpack.c.l.b16 %v1085
          %v1118 = vunpack.c.l.b16 %v1086
          %v1119 = vunpack.c.l.b16 %v1087
          %v1120 = vunpack.c.l.b16 %v1088
          %v1121 = vunpack.c.l.b16 %v1089
          %v1122 = vunpack.c.l.b16 %v1090
          %v1123 = vunpack.c.l.b16 %v1091
          %v1124 = vunpack.c.l.b16 %v1092
          %v1125 = vunpack.c.l.b16 %v1093
          %v1126 = vunpack.c.l.b16 %v1094
          %v1127 = vunpack.c.l.b16 %v1095
          %v1128 = vunpack.c.l.b16 %v1096
          %v1129 = vunpack.c.l.b16 %v1097
          %v1130 = vunpack.c.l.b16 %v1098
          %v1131 = vunpack.c.l.b16 %v1099
          %v1132 = vunpack.c.l.b16 %v1100
          %v1133 = vpack.c.b16 %v1118, %v1117
          %v1134 = vpack.c.b16 %v1120, %v1119
          %v1135 = vpack.c.b16 %v1122, %v1121
          %v1136 = vpack.c.b16 %v1124, %v1123
          %v1137 = vpack.c.b16 %v1126, %v1125
          %v1138 = vpack.c.b16 %v1128, %v1127
          %v1139 = vpack.c.b16 %v1130, %v1129
          %v1140 = vpack.c.b16 %v1132, %v1131
          %1149 = vmatprep.subr.bf16.mxu0 0
          %1150 = vmatpush1.bf16.msra.mxu0 %v1140
          %1151 = vmatprep.subr.bf16.mxu0 0
          %1152 = vmatpush1.bf16.msra.mxu0 %v1139
          %1153 = vmatprep.subr.bf16.mxu0 0
          %1154 = vmatpush1.bf16.msra.mxu0 %v1138
          %1155 = vmatprep.subr.bf16.mxu0 0
          %1156 = vmatpush1.bf16.msra.mxu0 %v1137
          %1157 = vmatprep.subr.bf16.mxu0 0
          %1158 = vmatpush1.bf16.msra.mxu0 %v1136
          %1159 = vmatprep.subr.bf16.mxu0 0
          %1160 = vmatpush1.bf16.msra.mxu0 %v1135
          %1161 = vmatprep.subr.bf16.mxu0 0
          %1162 = vmatpush1.bf16.msra.mxu0 %v1134
          %1163 = vmatprep.subr.bf16.mxu0 0
          %1164 = vmatpush1.bf16.msra.mxu0 %v1133
          %1165 = vmatprep.subr.bf16.mxu0 0
          %1166 = vmatpush2.bf16.msra.mxu0 0
          %1167 = vmatprep.subr.bf16.mxu0 0
          %1168 = vmatpush2.bf16.msra.mxu0 0
          %1169 = vmatprep.subr.bf16.mxu0 0
          %1170 = vmatpush2.bf16.msra.mxu0 0
          %1171 = vmatprep.subr.bf16.mxu0 0
          %1172 = vmatpush2.bf16.msra.mxu0 0
          %1173 = vmatprep.subr.bf16.mxu0 0
          %1174 = vmatpush2.bf16.msra.mxu0 0
          %1175 = vmatprep.subr.bf16.mxu0 0
          %1176 = vmatpush2.bf16.msra.mxu0 0
          %1177 = vmatprep.subr.bf16.mxu0 0
          %1178 = vmatpush2.bf16.msra.mxu0 0
          %1179 = vmatprep.subr.bf16.mxu0 0
          %1180 = vmatpush2.bf16.msra.mxu0 0
          %1181 = vmatprep.mubr.bf16.mxu0 0
          %1182 = vmatmul.mubr.bf16.gmra.mxu0 %v1084
          %v1183 = vpop.f32.mrf.mxu0
          %v1184 = vadd.f32 0.0, %v1183
          %v1185 = vpop.f32.mrf.mxu0
          %v1186 = vpop.f32.mrf.mxu0
          %v1187 = vadd.f32 0.0, %v1186
          %v1188 = vpop.f32.mrf.mxu0
          %1189 = vdwg.mxu0
          %s1190 = sld [smem:[#allocation4]]
          %v1191 = vstv %s1190
          %v1192 = vmul.f32 %v1184, %v1191
          %v1193 = vmul.f32 %v1187, %v1191
          %1194 = vst [vmem:[#allocation13] sm:$0xff] %v1192
          %1195 = vst [vmem:[#allocation13 + $0x8] sm:$0xff] %v1193
        $region68: #{tpu_custom_call.1} parent=39 // pred_fallthru
          _
        // Predicated region
        $region69: #{tpu_custom_call.1} parent=39 // pred_check
          %p1196 = pneg %p172
        $region70: #{tpu_custom_call.1} parent=39 // pred_check_branch
          %1198 = sbr.rel (%p1196) target = $region72
        $region71: #{tpu_custom_call.1} parent=39 // pred_region
          %s1199 = smul.u32 2, %s29
          %s1201 = ssub.s32 256, 256
          %1202 = vsyncadd [#allocation7], %s1201
          %s1203 = smul.addr %s1199, 128
          %s1204 = scalar_lea.hbm %s5, %s1203
          %s1205 = sshll.u32 [#allocation13], 4
          %s1206 = int_to_ptr.vmem [resolvable:$true] %s1205
          %1211 = dma.vmem_to_hbm [thread:$0]  %s1206, 256, %s1204, [#allocation7], 128, 128, 8
        $region72: #{tpu_custom_call.1} parent=39 // pred_fallthru
          _
        // Predicated region
        $region73: #{tpu_custom_call.1} parent=39 // pred_check
          %p1212 = pneg %p172
        $region74: #{tpu_custom_call.1} parent=39 // pred_check_branch
          %1214 = sbr.rel (%p1212) target = $region76
        $region75: #{tpu_custom_call.1} parent=39 // pred_region
          %1215 = dma.done [#allocation7], 256
        $region76: #{tpu_custom_call.1} parent=39 // pred_fallthru
          _
      $region40: #{tpu_custom_call.1} parent=5 // pred_fallthru
        _
      %p1216 = scmp.le.s32.totalorder 2, %s20
      // Predicated region
      $region77: #{tpu_custom_call.1} parent=5 // pred_check
        %p1217 = pneg %p1216
      $region78: #{tpu_custom_call.1} parent=5 // pred_check_branch
        %1219 = sbr.rel (%p1217) target = $region80
      $region79: #{tpu_custom_call.1} parent=5 // pred_region
        %s1220 = ssub.s32 %s20, 2
      $region80: #{tpu_custom_call.1} parent=5 // pred_fallthru
        _
    $region6: #{tpu_custom_call.1} parent=1 // loop_footer
      %s24 = sadd.s32 1, %s20
    $region7: #{tpu_custom_call.1} parent=1 // loop_footer_branch
      %19 = sbr.rel target = $region3
    $region8: #{tpu_custom_call.1} parent=1 // loop_exit
      _
    %1221 = vsyncpa [#allocation6], 1
    %s1222 = scalar_lea.sflag [#allocation6], 1
    %1223 = vsyncpa %s1222, 1
    %1224 = vsyncpa [#allocation9], 1
    %s1225 = scalar_lea.sflag [#allocation9], 1
    %1226 = vsyncpa %s1225, 1
    %1227 = vsyncpa [#allocation12], 1
    %1228 = vsyncpa [#allocation7], 1
    %s1229 = scalar_lea.sflag [#allocation7], 1
    %1230 = vsyncpa %s1229, 1

</llo_original>
